<compile_context>
chip_gen: v5e
topology: v5e:2x2
jax: 0.10.0
libtpu: 0.0.40
codegen_flags: <defaults>
</compile_context>

<pallas_src>
import jax
import jax.numpy as jnp
from jax import lax
from jax.experimental import pallas as pl
from jax.experimental.pallas import tpu as pltpu


_LANE_WIDTHS = (4096, 2048, 1024, 512, 256, 128)
_BLOCK_BYTES = 2 * 1024 * 1024   # ~2 MiB blocks: ~roofline on v5e/v6e, VMEM-safe on v7x


# ----------------------------------------------------------------------------
# Kernel: one lane-dense (block_rows, lanes) tile; keep-mask hashed on-chip.
# ----------------------------------------------------------------------------
def _instance_dropout_kernel(scalar_ref, x_ref, o_ref):
    seed_u = scalar_ref[0].astype(jnp.uint32)
    thr_u = scalar_ref[1].astype(jnp.uint32)      # drop threshold in [0, 2^32)

    nrows, ncols = x_ref.shape
    base = pl.program_id(0) * (nrows * ncols)     # global offset of this block
    row = lax.broadcasted_iota(jnp.int32, (nrows, ncols), 0)
    col = lax.broadcasted_iota(jnp.int32, (nrows, ncols), 1)
    gid = (base + row * ncols + col).astype(jnp.uint32)   # global flat element id

    # Counter-based RNG: seed-mixed murmur3 fmix32 avalanche of the element id.
    h = gid ^ (seed_u * jnp.uint32(0x9E3779B9))
    h = h ^ (h >> 16)
    h = h * jnp.uint32(0x85EBCA6B)
    h = h ^ (h >> 13)
    h = h * jnp.uint32(0xC2B2AE35)
    h = h ^ (h >> 16)

    # Single unsigned compare: P(h < thr) = drop_rate  ->  keep w.p. (1 - drop_rate).
    keep = h >= thr_u
    x = x_ref[...]
    o_ref[...] = jnp.where(keep, x, jnp.zeros_like(x))


# ----------------------------------------------------------------------------
# Wrapper: flatten to a lane-dense (rows, lanes) slab, tile rows, run, unflatten.
# ----------------------------------------------------------------------------
def instance_dropout_pallas(x, drop_rate, *, training=True, seed=0):
    # PyTorch does this branch at Python level -> identity, no kernel launch.
    if (not training) or drop_rate == 0.0:
        return x

    orig_shape = x.shape
    n = int(x.size)
    itemsize = x.dtype.itemsize
    # Sub-32-bit dtypes pack along sublanes: align to the native packed tile.
    row_align = {4: 8, 2: 16, 1: 32}.get(itemsize, 8)

    flat = x.reshape(-1)

    if n % 128 == 0:
        # Common NN case: exact reshape, no padding copy, widest lane dim possible.
        lanes = next(w for w in _LANE_WIDTHS if n % w == 0)
        rows = n // lanes
        padded = n
    else:
        # Ragged tail: fall back to 128 lanes + a single pad copy.
        # TODO(synk): handle the sub-128 tail with an in-kernel masked store
        # instead of materializing a padded copy of x.
        lanes = 128
        rows = pl.cdiv(n, lanes)
        padded = rows * lanes
        flat = jnp.pad(flat, (0, padded - n))

    x2 = flat.reshape(rows, lanes)

    # ~2 MiB row-blocks (per-grid-step overhead ~0.35us -> blocks must be MiB-scale
    # to sit near the HBM roofline; 2 MiB keeps 2x-buffered in + 2x-buffered out
    # plus the int/bool temporaries well under v7x's 64 MiB VMEM).
    target_rows = max(row_align,
                      (_BLOCK_BYTES // (lanes * itemsize)) // row_align * row_align)
    if rows <= target_rows:
        block_rows = rows          # one block; full-dim block needs no alignment
    else:
        block_rows = target_rows   # aligned; ragged last block is masked by Pallas
    grid = (pl.cdiv(rows, block_rows),)

    # seed + integer drop threshold via scalar prefetch: no recompile per drop_rate.
    thr = min(int(round(float(drop_rate) * 2.0 ** 32)), 2 ** 32 - 1)
    thr_i32 = thr - 2 ** 32 if thr >= 2 ** 31 else thr
    scalars = jnp.array([int(seed), thr_i32], dtype=jnp.int32)

    out2 = pl.pallas_call(
        _instance_dropout_kernel,
        out_shape=jax.ShapeDtypeStruct((rows, lanes), x2.dtype),
        grid_spec=pltpu.PrefetchScalarGridSpec(
            num_scalar_prefetch=1,
            grid=grid,
            in_specs=[pl.BlockSpec((block_rows, lanes), lambda i, s: (i, 0))],
            out_specs=pl.BlockSpec((block_rows, lanes), lambda i, s: (i, 0)),
        ),
        compiler_params=pltpu.CompilerParams(
            dimension_semantics=("parallel",),
            vmem_limit_bytes=32 * 1024 * 1024,
        ),
    )(scalars, x2)

    if padded != n:
        return out2.reshape(-1)[:n].reshape(orig_shape)
    return out2.reshape(orig_shape)


# ----------------------------------------------------------------------------
# Smoke test.
# ----------------------------------------------------------------------------
if __name__ == "__main__":
    B, C, H, W = 2, 4, 16, 16               # 2048 elements -> exact lane-dense reshape
    drop_rate = 0.25
    seed = 1234

    key = jax.random.PRNGKey(0)
    x = jax.random.normal(key, (B, C, H, W), jnp.float32)

    # --- training path: random mask, no rescaling -----------------------------
    out = instance_dropout_pallas(x, drop_rate, training=True, seed=seed)
    out = jax.block_until_ready(out)
    assert out.shape == x.shape
    assert bool(jnp.all(jnp.isfinite(out)))

    # Every element is either dropped (0) or passed through untouched (no rescale).
    passthrough_ok = bool(jnp.all((out == 0.0) | (out == x)))
    if not passthrough_ok:
        raise SystemExit("dropout produced values that are neither 0 nor x (rescaled?)")

    # Empirical drop fraction should be near drop_rate (2048 samples, generous bounds).
    drop_frac = float(jnp.mean((out == 0.0).astype(jnp.float32)))
    if not (0.15 <= drop_frac <= 0.35):
        raise SystemExit(f"drop fraction {drop_frac:.3f} far from drop_rate={drop_rate}")

    # Deterministic per seed.
    out2 = jax.block_until_ready(
        instance_dropout_pallas(x, drop_rate, training=True, seed=seed))
    if not bool(jnp.all(out == out2)):
        raise SystemExit("same seed produced different masks")

    # --- eval path and drop_rate == 0: exact identity --------------------------
    out_eval = jax.block_until_ready(
        instance_dropout_pallas(x, drop_rate, training=False, seed=seed))
    out_p0 = jax.block_until_ready(
        instance_dropout_pallas(x, 0.0, training=True, seed=seed))
    if not (bool(jnp.all(out_eval == x)) and bool(jnp.all(out_p0 == x))):
        raise SystemExit("identity path (eval / p=0) did not return x unchanged")

    print("KERNEL_OK")
</pallas_src>

<mosaic_0001>
module attributes {stable_mosaic.version = 11 : i64} {
  func.func @_instance_dropout_kernel(%arg0: i32, %arg1: memref<2xi32, #tpu.memory_space<smem>>, %arg2: memref<1x2048xf32, #tpu.memory_space<vmem>>, %arg3: memref<1x2048xf32, #tpu.memory_space<vmem>>) attributes {dimension_semantics = [#tpu.dimension_semantics<parallel>], iteration_bounds = array<i64: 1>, scalar_prefetch = 1 : i64, scratch_operands = 0 : i64, tpu.core_type = #tpu.core_type<tc>, window_params = [{transform_indices = @transform_0, window_bounds = array<i64: 1, 2048>}, {transform_indices = @transform_1, window_bounds = array<i64: 1, 2048>}]} {
    %c0 = arith.constant 0 : index
    %0 = memref.load %arg1[%c0] : memref<2xi32, #tpu.memory_space<smem>>
    %c1 = arith.constant 1 : index
    %1 = memref.load %arg1[%c1] : memref<2xi32, #tpu.memory_space<smem>>
    %c2048_i32 = arith.constant 2048 : i32
    %2 = arith.muli %arg0, %c2048_i32 : i32
    %3 = tpu.iota {dimensions = array<i32: 0>} : vector<1x2048xi32>
    %4 = tpu.iota {dimensions = array<i32: 1>} : vector<1x2048xi32>
    %c2048_i32_0 = arith.constant 2048 : i32
    %5 = vector.broadcast %c2048_i32_0 : i32 to vector<1x2048xi32>
    %6 = arith.muli %3, %5 : vector<1x2048xi32>
    %7 = vector.broadcast %2 : i32 to vector<1x2048xi32>
    %8 = arith.addi %7, %6 : vector<1x2048xi32>
    %9 = arith.addi %8, %4 : vector<1x2048xi32>
    %c-1640531527_i32 = arith.constant -1640531527 : i32
    %10 = arith.muli %0, %c-1640531527_i32 : i32
    %11 = vector.broadcast %10 : i32 to vector<1x2048xi32>
    %12 = arith.xori %9, %11 : vector<1x2048xi32>
    %c16_i32 = arith.constant 16 : i32
    %13 = vector.broadcast %c16_i32 : i32 to vector<1x2048xi32>
    %14 = arith.shrui %12, %13 : vector<1x2048xi32>
    %15 = arith.xori %12, %14 : vector<1x2048xi32>
    %c-2048144789_i32 = arith.constant -2048144789 : i32
    %16 = vector.broadcast %c-2048144789_i32 : i32 to vector<1x2048xi32>
    %17 = arith.muli %15, %16 : vector<1x2048xi32>
    %c13_i32 = arith.constant 13 : i32
    %18 = vector.broadcast %c13_i32 : i32 to vector<1x2048xi32>
    %19 = arith.shrui %17, %18 : vector<1x2048xi32>
    %20 = arith.xori %17, %19 : vector<1x2048xi32>
    %c-1028477387_i32 = arith.constant -1028477387 : i32
    %21 = vector.broadcast %c-1028477387_i32 : i32 to vector<1x2048xi32>
    %22 = arith.muli %20, %21 : vector<1x2048xi32>
    %c16_i32_1 = arith.constant 16 : i32
    %23 = vector.broadcast %c16_i32_1 : i32 to vector<1x2048xi32>
    %24 = arith.shrui %22, %23 : vector<1x2048xi32>
    %25 = arith.xori %22, %24 : vector<1x2048xi32>
    %26 = vector.broadcast %1 : i32 to vector<1x2048xi32>
    %27 = arith.cmpi uge, %25, %26 : vector<1x2048xi32>
    %c0_2 = arith.constant 0 : index
    %c0_3 = arith.constant 0 : index
    %28 = vector.load %arg2[%c0_2, %c0_3] : memref<1x2048xf32, #tpu.memory_space<vmem>>, vector<1x2048xf32>
    %cst = arith.constant 0.000000e+00 : f32
    %29 = vector.broadcast %cst : f32 to vector<1x2048xf32>
    %30 = arith.select %27, %28, %29 : vector<1x2048xi1>, vector<1x2048xf32>
    %c0_4 = arith.constant 0 : index
    %c0_5 = arith.constant 0 : index
    %31 = vector.load %arg3[%c0_4, %c0_5] : memref<1x2048xf32, #tpu.memory_space<vmem>>, vector<1x2048xf32>
    tpu.vector_store %arg3[%c0_4, %c0_5], %30 {strides = array<i32>} : memref<1x2048xf32, #tpu.memory_space<vmem>>, vector<1x2048xf32>,
    return
  }
  func.func @transform_0(%arg0: i32, %arg1: memref<2xi32, #tpu.memory_space<smem>>) -> (i32, i32) {
    %c0_i32 = arith.constant 0 : i32
    %c0_i32_0 = arith.constant 0 : i32
    return %arg0, %c0_i32 : i32, i32
  }
  func.func @transform_1(%arg0: i32, %arg1: memref<2xi32, #tpu.memory_space<smem>>) -> (i32, i32) {
    %c0_i32 = arith.constant 0 : i32
    %c0_i32_0 = arith.constant 0 : i32
    return %arg0, %c0_i32 : i32, i32
  }
}

</mosaic_0001>

<llo_original>
// kernel: tpu_custom_call.1
$region0: #{tpu_custom_call.1}
  #allocation0 [shape = 'u32[]', space=smem, size = 0x4, offset = 0x4, fixed_abs, tag = 'smem constant byte address 0x4 - core index']
  #allocation1 [shape = 'u32[72,128]{1,0:T(1,128)}', space=vmem, size = 0x9000, scoped, tag = 'internal scratch']
  #allocation2 [shape = 's32[1]{0}', space=sflag, size = 0x4, scoped, tag = 'scoped memory for tpu_custom_call.1']
  #allocation3 [shape = 'u8[512]{0}', space=smem, size = 0x200, scoped, tag = 'prefetched SMEM operand 0']
  %s0 = inlined_call_operand.hbm [shape: s32[2], index: 0, kind: input, shape index: {}]
  %s1 = inlined_call_operand.hbm [shape: f32[1,2048], index: 1, kind: input, shape index: {}]
  %s2 = inlined_call_operand.hbm [shape: f32[1,2048], index: 2, kind: output, shape index: {}]
  %s3 = sld [smem:[#allocation0]]
  $region18: #{tpu_custom_call.1} parent=0
    _
  %s5 = ssub.s32 1, %s3
  %s6 = scalar_select 0, %s5, %s3
  %s8 = sshll.u32 %s0, 4
  %s9 = int_to_ptr.hbm [resolvable:$true] %s8
  %11 = dma.hbm_to_smem %s9, 16, [#allocation3], [#allocation2]
  %13 = dma.done [#allocation2], 16
  %14 = sfence
  $region1: #{tpu_custom_call.1} parent=0
    #allocation4 [shape = 'u8[8192]{0}', space=vmem, size = 0x2000, scoped, tag = 'input window, operand 1, single buffered']
    #allocation5 [shape = 's32[1]{0}', space=sflag, size = 0x4, scoped, tag = 'scoped memory for tpu_custom_call.1']
    #allocation6 [shape = 's32[1]{0}', space=sflag, size = 0x4, scoped, tag = 'scoped memory for tpu_custom_call.1']
    #allocation7 [shape = 'u8[8192]{0}', space=vmem, size = 0x2000, scoped, tag = 'output window, operand 0, single buffered']
    %15 = vsyncpa [#allocation5], 0
    %16 = vsyncpa [#allocation6], 0
    // Predicated region
    $region2: #{tpu_custom_call.1} parent=1 // pred_check
      _
    $region3: #{tpu_custom_call.1} parent=1 // pred_check_branch
      %18 = sbr.rel (0) target = $region5
    $region4: #{tpu_custom_call.1} parent=1 // pred_region
      %20 = vsyncadd [#allocation5], 0
      %s22 = sshll.u32 %s1, 4
      %s23 = int_to_ptr.hbm [resolvable:$true] %s22
      %s24 = sshll.u32 [#allocation4], 4
      %s25 = int_to_ptr.vmem [resolvable:$true] %s24
      %27 = dma.hbm_to_vmem [thread:$0]  %s23, 256, %s25, [#allocation5]
    $region5: #{tpu_custom_call.1} parent=1 // pred_fallthru
      _
    // Predicated region
    $region6: #{tpu_custom_call.1} parent=1 // pred_check
      _
    $region7: #{tpu_custom_call.1} parent=1 // pred_check_branch
      %29 = sbr.rel (0) target = $region9
    $region8: #{tpu_custom_call.1} parent=1 // pred_region
      %31 = dma.done [#allocation5], 256
    $region9: #{tpu_custom_call.1} parent=1 // pred_fallthru
      _
    %s32 = sld [smem:[#allocation3]]
    %s33 = sld [smem:[#allocation3 + $0x1]]
    %s34 = smul.u32 0, 2048
    %v35 = vlaneseq
    %v36 = vshrl.u32 %v35, 7
    %v37 = vlaneseq
    %v38 = vand.u32 %v37, 127
    %v39 = vadd.s32 %v38, 128
    %v40 = vadd.s32 %v38, 256
    %v41 = vadd.s32 %v38, 384
    %v42 = vadd.s32 %v38, 512
    %v43 = vadd.s32 %v38, 640
    %v44 = vadd.s32 %v38, 768
    %v45 = vadd.s32 %v38, 896
    %v46 = vadd.s32 %v38, 1024
    %v47 = vadd.s32 %v38, 1152
    %v48 = vadd.s32 %v38, 1280
    %v49 = vadd.s32 %v38, 1408
    %v50 = vadd.s32 %v38, 1536
    %v51 = vadd.s32 %v38, 1664
    %v52 = vadd.s32 %v38, 1792
    %v53 = vadd.s32 %v38, 1920
    %v54 = vmul.u32 %v36, 2048
    %v55 = vstv %s34
    %v56 = vadd.s32 %v55, %v54
    %v57 = vadd.s32 %v56, %v38
    %v58 = vadd.s32 %v56, %v39
    %v59 = vadd.s32 %v56, %v40
    %v60 = vadd.s32 %v56, %v41
    %v61 = vadd.s32 %v56, %v42
    %v62 = vadd.s32 %v56, %v43
    %v63 = vadd.s32 %v56, %v44
    %v64 = vadd.s32 %v56, %v45
    %v65 = vadd.s32 %v56, %v46
    %v66 = vadd.s32 %v56, %v47
    %v67 = vadd.s32 %v56, %v48
    %v68 = vadd.s32 %v56, %v49
    %v69 = vadd.s32 %v56, %v50
    %v70 = vadd.s32 %v56, %v51
    %v71 = vadd.s32 %v56, %v52
    %v72 = vadd.s32 %v56, %v53
    %s73 = smul.u32 %s32, 2654435769
    %v74 = vstv %s73
    %v75 = vxor.u32 %v57, %v74
    %v76 = vxor.u32 %v58, %v74
    %v77 = vxor.u32 %v59, %v74
    %v78 = vxor.u32 %v60, %v74
    %v79 = vxor.u32 %v61, %v74
    %v80 = vxor.u32 %v62, %v74
    %v81 = vxor.u32 %v63, %v74
    %v82 = vxor.u32 %v64, %v74
    %v83 = vxor.u32 %v65, %v74
    %v84 = vxor.u32 %v66, %v74
    %v85 = vxor.u32 %v67, %v74
    %v86 = vxor.u32 %v68, %v74
    %v87 = vxor.u32 %v69, %v74
    %v88 = vxor.u32 %v70, %v74
    %v89 = vxor.u32 %v71, %v74
    %v90 = vxor.u32 %v72, %v74
    %v91 = vshrl.u32 %v75, 16
    %v92 = vshrl.u32 %v76, 16
    %v93 = vshrl.u32 %v77, 16
    %v94 = vshrl.u32 %v78, 16
    %v95 = vshrl.u32 %v79, 16
    %v96 = vshrl.u32 %v80, 16
    %v97 = vshrl.u32 %v81, 16
    %v98 = vshrl.u32 %v82, 16
    %v99 = vshrl.u32 %v83, 16
    %v100 = vshrl.u32 %v84, 16
    %v101 = vshrl.u32 %v85, 16
    %v102 = vshrl.u32 %v86, 16
    %v103 = vshrl.u32 %v87, 16
    %v104 = vshrl.u32 %v88, 16
    %v105 = vshrl.u32 %v89, 16
    %v106 = vshrl.u32 %v90, 16
    %v107 = vxor.u32 %v75, %v91
    %v108 = vxor.u32 %v76, %v92
    %v109 = vxor.u32 %v77, %v93
    %v110 = vxor.u32 %v78, %v94
    %v111 = vxor.u32 %v79, %v95
    %v112 = vxor.u32 %v80, %v96
    %v113 = vxor.u32 %v81, %v97
    %v114 = vxor.u32 %v82, %v98
    %v115 = vxor.u32 %v83, %v99
    %v116 = vxor.u32 %v84, %v100
    %v117 = vxor.u32 %v85, %v101
    %v118 = vxor.u32 %v86, %v102
    %v119 = vxor.u32 %v87, %v103
    %v120 = vxor.u32 %v88, %v104
    %v121 = vxor.u32 %v89, %v105
    %v122 = vxor.u32 %v90, %v106
    %v123 = vmul.u32 %v107, 2246822507
    %v124 = vmul.u32 %v108, 2246822507
    %v125 = vmul.u32 %v109, 2246822507
    %v126 = vmul.u32 %v110, 2246822507
    %v127 = vmul.u32 %v111, 2246822507
    %v128 = vmul.u32 %v112, 2246822507
    %v129 = vmul.u32 %v113, 2246822507
    %v130 = vmul.u32 %v114, 2246822507
    %v131 = vmul.u32 %v115, 2246822507
    %v132 = vmul.u32 %v116, 2246822507
    %v133 = vmul.u32 %v117, 2246822507
    %v134 = vmul.u32 %v118, 2246822507
    %v135 = vmul.u32 %v119, 2246822507
    %v136 = vmul.u32 %v120, 2246822507
    %v137 = vmul.u32 %v121, 2246822507
    %v138 = vmul.u32 %v122, 2246822507
    %v139 = vshrl.u32 %v123, 13
    %v140 = vshrl.u32 %v124, 13
    %v141 = vshrl.u32 %v125, 13
    %v142 = vshrl.u32 %v126, 13
    %v143 = vshrl.u32 %v127, 13
    %v144 = vshrl.u32 %v128, 13
    %v145 = vshrl.u32 %v129, 13
    %v146 = vshrl.u32 %v130, 13
    %v147 = vshrl.u32 %v131, 13
    %v148 = vshrl.u32 %v132, 13
    %v149 = vshrl.u32 %v133, 13
    %v150 = vshrl.u32 %v134, 13
    %v151 = vshrl.u32 %v135, 13
    %v152 = vshrl.u32 %v136, 13
    %v153 = vshrl.u32 %v137, 13
    %v154 = vshrl.u32 %v138, 13
    %v155 = vxor.u32 %v123, %v139
    %v156 = vxor.u32 %v124, %v140
    %v157 = vxor.u32 %v125, %v141
    %v158 = vxor.u32 %v126, %v142
    %v159 = vxor.u32 %v127, %v143
    %v160 = vxor.u32 %v128, %v144
    %v161 = vxor.u32 %v129, %v145
    %v162 = vxor.u32 %v130, %v146
    %v163 = vxor.u32 %v131, %v147
    %v164 = vxor.u32 %v132, %v148
    %v165 = vxor.u32 %v133, %v149
    %v166 = vxor.u32 %v134, %v150
    %v167 = vxor.u32 %v135, %v151
    %v168 = vxor.u32 %v136, %v152
    %v169 = vxor.u32 %v137, %v153
    %v170 = vxor.u32 %v138, %v154
    %v171 = vmul.u32 %v155, 3266489909
    %v172 = vmul.u32 %v156, 3266489909
    %v173 = vmul.u32 %v157, 3266489909
    %v174 = vmul.u32 %v158, 3266489909
    %v175 = vmul.u32 %v159, 3266489909
    %v176 = vmul.u32 %v160, 3266489909
    %v177 = vmul.u32 %v161, 3266489909
    %v178 = vmul.u32 %v162, 3266489909
    %v179 = vmul.u32 %v163, 3266489909
    %v180 = vmul.u32 %v164, 3266489909
    %v181 = vmul.u32 %v165, 3266489909
    %v182 = vmul.u32 %v166, 3266489909
    %v183 = vmul.u32 %v167, 3266489909
    %v184 = vmul.u32 %v168, 3266489909
    %v185 = vmul.u32 %v169, 3266489909
    %v186 = vmul.u32 %v170, 3266489909
    %v187 = vshrl.u32 %v171, 16
    %v188 = vshrl.u32 %v172, 16
    %v189 = vshrl.u32 %v173, 16
    %v190 = vshrl.u32 %v174, 16
    %v191 = vshrl.u32 %v175, 16
    %v192 = vshrl.u32 %v176, 16
    %v193 = vshrl.u32 %v177, 16
    %v194 = vshrl.u32 %v178, 16
    %v195 = vshrl.u32 %v179, 16
    %v196 = vshrl.u32 %v180, 16
    %v197 = vshrl.u32 %v181, 16
    %v198 = vshrl.u32 %v182, 16
    %v199 = vshrl.u32 %v183, 16
    %v200 = vshrl.u32 %v184, 16
    %v201 = vshrl.u32 %v185, 16
    %v202 = vshrl.u32 %v186, 16
    %v203 = vxor.u32 %v171, %v187
    %v204 = vxor.u32 %v172, %v188
    %v205 = vxor.u32 %v173, %v189
    %v206 = vxor.u32 %v174, %v190
    %v207 = vxor.u32 %v175, %v191
    %v208 = vxor.u32 %v176, %v192
    %v209 = vxor.u32 %v177, %v193
    %v210 = vxor.u32 %v178, %v194
    %v211 = vxor.u32 %v179, %v195
    %v212 = vxor.u32 %v180, %v196
    %v213 = vxor.u32 %v181, %v197
    %v214 = vxor.u32 %v182, %v198
    %v215 = vxor.u32 %v183, %v199
    %v216 = vxor.u32 %v184, %v200
    %v217 = vxor.u32 %v185, %v201
    %v218 = vxor.u32 %v186, %v202
    %v219 = vstv %s33
    %v220 = vadd.s32 %v203, 2147483648
    %v221 = vadd.s32 %v219, 2147483648
    %vm222 = vcmp.ge.s32.totalorder %v220, %v221
    %v223 = vadd.s32 %v204, 2147483648
    %v224 = vadd.s32 %v219, 2147483648
    %vm225 = vcmp.ge.s32.totalorder %v223, %v224
    %v226 = vadd.s32 %v205, 2147483648
    %v227 = vadd.s32 %v219, 2147483648
    %vm228 = vcmp.ge.s32.totalorder %v226, %v227
    %v229 = vadd.s32 %v206, 2147483648
    %v230 = vadd.s32 %v219, 2147483648
    %vm231 = vcmp.ge.s32.totalorder %v229, %v230
    %v232 = vadd.s32 %v207, 2147483648
    %v233 = vadd.s32 %v219, 2147483648
    %vm234 = vcmp.ge.s32.totalorder %v232, %v233
    %v235 = vadd.s32 %v208, 2147483648
    %v236 = vadd.s32 %v219, 2147483648
    %vm237 = vcmp.ge.s32.totalorder %v235, %v236
    %v238 = vadd.s32 %v209, 2147483648
    %v239 = vadd.s32 %v219, 2147483648
    %vm240 = vcmp.ge.s32.totalorder %v238, %v239
    %v241 = vadd.s32 %v210, 2147483648
    %v242 = vadd.s32 %v219, 2147483648
    %vm243 = vcmp.ge.s32.totalorder %v241, %v242
    %v244 = vadd.s32 %v211, 2147483648
    %v245 = vadd.s32 %v219, 2147483648
    %vm246 = vcmp.ge.s32.totalorder %v244, %v245
    %v247 = vadd.s32 %v212, 2147483648
    %v248 = vadd.s32 %v219, 2147483648
    %vm249 = vcmp.ge.s32.totalorder %v247, %v248
    %v250 = vadd.s32 %v213, 2147483648
    %v251 = vadd.s32 %v219, 2147483648
    %vm252 = vcmp.ge.s32.totalorder %v250, %v251
    %v253 = vadd.s32 %v214, 2147483648
    %v254 = vadd.s32 %v219, 2147483648
    %vm255 = vcmp.ge.s32.totalorder %v253, %v254
    %v256 = vadd.s32 %v215, 2147483648
    %v257 = vadd.s32 %v219, 2147483648
    %vm258 = vcmp.ge.s32.totalorder %v256, %v257
    %v259 = vadd.s32 %v216, 2147483648
    %v260 = vadd.s32 %v219, 2147483648
    %vm261 = vcmp.ge.s32.totalorder %v259, %v260
    %v262 = vadd.s32 %v217, 2147483648
    %v263 = vadd.s32 %v219, 2147483648
    %vm264 = vcmp.ge.s32.totalorder %v262, %v263
    %v265 = vadd.s32 %v218, 2147483648
    %v266 = vadd.s32 %v219, 2147483648
    %vm267 = vcmp.ge.s32.totalorder %v265, %v266
    %v268 = vld [vmem:[#allocation4] sm:$0xff]
    %v269 = vld [vmem:[#allocation4 + $0x8] sm:$0xff]
    %v272 = vperm.slane %v268, 0
    %v273 = vperm.slane %v268, 1
    %v274 = vperm.slane %v268, 2
    %v275 = vperm.slane %v268, 3
    %v276 = vperm.slane %v268, 4
    %v277 = vperm.slane %v268, 5
    %v278 = vperm.slane %v268, 6
    %v279 = vperm.slane %v268, 7
    %v280 = vperm.slane %v269, 0
    %v281 = vperm.slane %v269, 1
    %v282 = vperm.slane %v269, 2
    %v283 = vperm.slane %v269, 3
    %v284 = vperm.slane %v269, 4
    %v285 = vperm.slane %v269, 5
    %v286 = vperm.slane %v269, 6
    %v287 = vperm.slane %v269, 7
    %v304 = vsel %vm222, %v272, 0.0
    %v305 = vsel %vm225, %v273, 0.0
    %v306 = vsel %vm228, %v274, 0.0
    %v307 = vsel %vm231, %v275, 0.0
    %v308 = vsel %vm234, %v276, 0.0
    %v309 = vsel %vm237, %v277, 0.0
    %v310 = vsel %vm240, %v278, 0.0
    %v311 = vsel %vm243, %v279, 0.0
    %v312 = vsel %vm246, %v280, 0.0
    %v313 = vsel %vm249, %v281, 0.0
    %v314 = vsel %vm252, %v282, 0.0
    %v315 = vsel %vm255, %v283, 0.0
    %v316 = vsel %vm258, %v284, 0.0
    %v317 = vsel %vm261, %v285, 0.0
    %v318 = vsel %vm264, %v286, 0.0
    %v319 = vsel %vm267, %v287, 0.0
    %v336 = vrot.slane %v305, 7
    %v337 = vrot.slane %v306, 6
    %v338 = vrot.slane %v307, 5
    %v339 = vrot.slane %v308, 4
    %v340 = vrot.slane %v309, 3
    %v341 = vrot.slane %v310, 2
    %v342 = vrot.slane %v311, 1
    %v343 = vrot.slane %v313, 7
    %v344 = vrot.slane %v314, 6
    %v345 = vrot.slane %v315, 5
    %v346 = vrot.slane %v316, 4
    %v347 = vrot.slane %v317, 3
    %v348 = vrot.slane %v318, 2
    %v349 = vrot.slane %v319, 1
    %vm350 = vcmask 1040384
    %v351 = vsel %vm350, %v304, %v336
    %vm352 = vcmask 1042434
    %v353 = vsel %vm352, %v337, %v338
    %vm354 = vcmask 1041408
    %v355 = vsel %vm354, %v351, %v353
    %vm356 = vcmask 1044484
    %v357 = vsel %vm356, %v339, %v340
    %vm358 = vcmask 1046534
    %v359 = vsel %vm358, %v341, %v342
    %vm360 = vcmask 1045508
    %v361 = vsel %vm360, %v357, %v359
    %vm362 = vcmask 1043456
    %v363 = vsel %vm362, %v355, %v361
    %v364 = vsel %vm350, %v312, %v343
    %v365 = vsel %vm352, %v344, %v345
    %v366 = vsel %vm354, %v364, %v365
    %v367 = vsel %vm356, %v346, %v347
    %v368 = vsel %vm358, %v348, %v349
    %v369 = vsel %vm360, %v367, %v368
    %v370 = vsel %vm362, %v366, %v369
    %373 = vst [vmem:[#allocation7] sm:$0xff] %v363
    %374 = vst [vmem:[#allocation7 + $0x8] sm:$0xff] %v370
    // Predicated region
    $region10: #{tpu_custom_call.1} parent=1 // pred_check
      _
    $region11: #{tpu_custom_call.1} parent=1 // pred_check_branch
      %376 = sbr.rel (0) target = $region13
    $region12: #{tpu_custom_call.1} parent=1 // pred_region
      %378 = vsyncadd [#allocation6], 0
      %s380 = sshll.u32 [#allocation7], 4
      %s381 = int_to_ptr.vmem [resolvable:$true] %s380
      %s382 = sshll.u32 %s2, 4
      %s383 = int_to_ptr.hbm [resolvable:$true] %s382
      %385 = dma.vmem_to_hbm [thread:$0]  %s381, 256, %s383, [#allocation6]
    $region13: #{tpu_custom_call.1} parent=1 // pred_fallthru
      _
    // Predicated region
    $region14: #{tpu_custom_call.1} parent=1 // pred_check
      _
    $region15: #{tpu_custom_call.1} parent=1 // pred_check_branch
      %387 = sbr.rel (0) target = $region17
    $region16: #{tpu_custom_call.1} parent=1 // pred_region
      %389 = dma.done [#allocation6], 256
    $region17: #{tpu_custom_call.1} parent=1 // pred_fallthru
      _
    %390 = vsyncpa [#allocation5], 1
    %391 = vsyncpa [#allocation6], 1

</llo_original>
